<compile_context>
chip_gen: v7x
topology: tpu7x:2x2x1
jax: 0.10.0
libtpu: 0.0.40
codegen_flags: <defaults>
</compile_context>

<pallas_src>
import functools

import jax
import jax.numpy as jnp
from jax.experimental import pallas as pl
from jax.experimental.pallas import tpu as pltpu


def _round_up(n, m):
    return ((n + m - 1) // m) * m


def mlp_kernel(xT_ref, pT_ref,
               w1x_ref, w1p_ref, b1_ref,
               w2_ref, b2_ref,
               w3_ref, b3_ref,
               w4_ref, b4_ref,
               o_ref):
    # Layer 1: tanh(W1x @ x^T + W1p_scaled @ p^T + b1)   -> (18, tile_b)
    h = jnp.dot(w1x_ref[...], xT_ref[...], preferred_element_type=jnp.float32)
    h = h + jnp.dot(w1p_ref[...], pT_ref[...], preferred_element_type=jnp.float32)
    h = jnp.tanh(h + b1_ref[...])
    # Layer 2 / 3: tanh(W @ h + b)                        -> (18, tile_b)
    h = jnp.tanh(jnp.dot(w2_ref[...], h, preferred_element_type=jnp.float32)
                 + b2_ref[...])
    h = jnp.tanh(jnp.dot(w3_ref[...], h, preferred_element_type=jnp.float32)
                 + b3_ref[...])
    # Layer 4: W4 @ h + b4                                -> (1, tile_b), lane-dense
    o_ref[...] = (jnp.dot(w4_ref[...], h, preferred_element_type=jnp.float32)
                  + b4_ref[...])


def make_params(inlen, key):
    """Synthetic PyTorch-style nn.Linear params: [(W (out,in), b (out,)), ...]."""
    dims = [(inlen + 3, 18), (18, 18), (18, 18), (18, 1)]
    params = []
    for din, dout in dims:
        key, kw, kb = jax.random.split(key, 3)
        bound = 1.0 / (din ** 0.5)        # mimic PyTorch default Linear init
        W = jax.random.uniform(kw, (dout, din), jnp.float32, -bound, bound)
        b = jax.random.uniform(kb, (dout,), jnp.float32, -bound, bound)
        params.append((W, b))
    return params


def prep_params(torch_params, inlen):
    """Convert PyTorch-layout params into the kernel layout.

    - weights kept in torch (out, in) layout (kernel computes h = W @ x)
    - fc1 weight split into x-columns (18, inlen) and p-columns (18, 3); the
      1/50 scaling of p2 is folded into p-column index 1
    - biases stored as (out, 1) columns (broadcast-added along lanes in-kernel)
    """
    (W1, b1), (W2, b2), (W3, b3), (W4, b4) = (
        (jnp.asarray(W, jnp.float32), jnp.asarray(b, jnp.float32))
        for (W, b) in torch_params)
    w1x = W1[:, :inlen]                          # (18, inlen)
    w1p = W1[:, inlen:]                          # (18, 3)
    w1p = w1p.at[:, 1].multiply(1.0 / 50.0)      # bake in p2 / 50.0
    return (w1x, w1p, b1[:, None],
            W2, b2[:, None],
            W3, b3[:, None],
            W4, b4[:, None])


def _choose_tiling(B, tile_b_max):
    """Pick a lane-multiple tile size with >=2 grid steps when possible."""
    B_lane = _round_up(B, 128)                   # lane width
    tile_b = min(tile_b_max, B_lane)
    if B_lane > 128 and B_lane // tile_b < 2:
        # give the v7x megacore >=2 grid steps to shard (no effect on v5e/v6e)
        tile_b = _round_up(pl.cdiv(B_lane, 2), 128)
    B_pad = _round_up(B_lane, tile_b)
    return tile_b, B_pad


def net_forward(x, p1, p2, p3, kparams, *, tile_b_max=8192):
    """x: (B, inlen) f32; p1,p2,p3: (B, 1) f32.  Returns (B, 1, 1) f32."""
    B, inlen = x.shape
    tile_b, B_pad = _choose_tiling(B, tile_b_max)

    # Wrapper-side layout plumbing: present batch on the lane axis.
    xT = x.T                                            # (inlen, B)
    pT = jnp.concatenate([p1, p2, p3], axis=1).T        # (3, B)
    if B_pad != B:
        xT = jnp.pad(xT, ((0, 0), (0, B_pad - B)))
        pT = jnp.pad(pT, ((0, 0), (0, B_pad - B)))

    w1x, w1p, b1, w2, b2, w3, b3, w4, b4 = kparams

    def lane_spec(rows):
        # lane-dense per-tile blocks, pipelined (double-buffered) over the grid
        return pl.BlockSpec((rows, tile_b), lambda i: (0, i))

    def const_spec(shape):
        # full-array block, constant index -> fetched once, VMEM-resident
        return pl.BlockSpec(shape, lambda i: (0, 0))

    out = pl.pallas_call(
        mlp_kernel,
        out_shape=jax.ShapeDtypeStruct((1, B_pad), jnp.float32),
        grid=(B_pad // tile_b,),
        in_specs=[
            lane_spec(inlen), lane_spec(3),
            const_spec(w1x.shape), const_spec(w1p.shape), const_spec(b1.shape),
            const_spec(w2.shape), const_spec(b2.shape),
            const_spec(w3.shape), const_spec(b3.shape),
            const_spec(w4.shape), const_spec(b4.shape),
        ],
        out_specs=lane_spec(1),
        compiler_params=pltpu.CompilerParams(
            dimension_semantics=("parallel",)),
    )(xT, pT, w1x, w1p, b1, w2, b2, w3, b3, w4, b4)

    out = out[:, :B].T                           # (B, 1)
    return out[:, None, :]                       # torch: out5.unsqueeze(dim=1)


def _reference(x, p1, p2, p3, torch_params):
    (W1, b1), (W2, b2), (W3, b3), (W4, b4) = torch_params
    xin = jnp.concatenate([x, p1, p2 / 50.0, p3], axis=1)
    r = jnp.tanh(xin @ W1.T + b1)
    r = jnp.tanh(r @ W2.T + b2)
    r = jnp.tanh(r @ W3.T + b3)
    return (r @ W4.T + b4)[:, None, :]


if __name__ == "__main__":
    inlen = 8
    key = jax.random.PRNGKey(0)
    key, kparams_key = jax.random.split(key)
    torch_params = make_params(inlen, kparams_key)
    kparams = prep_params(torch_params, inlen)

    fwd = jax.jit(functools.partial(net_forward, tile_b_max=8192))

    # small single-tile batch and a multi-tile (padded, 2-step grid) batch
    for B in (8, 300):
        key, kx, kp1, kp2, kp3 = jax.random.split(key, 5)
        x = jax.random.normal(kx, (B, inlen), jnp.float32)
        p1 = jax.random.normal(kp1, (B, 1), jnp.float32)
        p2 = jax.random.normal(kp2, (B, 1), jnp.float32) * 50.0
        p3 = jax.random.normal(kp3, (B, 1), jnp.float32)

        out = fwd(x, p1, p2, p3, kparams)
        jax.block_until_ready(out)
        assert out.shape == (B, 1, 1), out.shape

        ref = _reference(x, p1, p2, p3, torch_params)
        err = float(jnp.abs(out - ref).max())
        assert jnp.allclose(out, ref, atol=1e-3, rtol=1e-3), err

    print("KERNEL_OK")
</pallas_src>

<mosaic_0001>
module attributes {stable_mosaic.version = 11 : i64} {
  func.func @mlp_kernel(%arg0: i32, %arg1: memref<8x128xf32, #tpu.memory_space<vmem>>, %arg2: memref<3x128xf32, #tpu.memory_space<vmem>>, %arg3: memref<18x8xf32, #tpu.memory_space<vmem>>, %arg4: memref<18x3xf32, #tpu.memory_space<vmem>>, %arg5: memref<18x1xf32, #tpu.memory_space<vmem>>, %arg6: memref<18x18xf32, #tpu.memory_space<vmem>>, %arg7: memref<18x1xf32, #tpu.memory_space<vmem>>, %arg8: memref<18x18xf32, #tpu.memory_space<vmem>>, %arg9: memref<18x1xf32, #tpu.memory_space<vmem>>, %arg10: memref<1x18xf32, #tpu.memory_space<vmem>>, %arg11: memref<1x1xf32, #tpu.memory_space<vmem>>, %arg12: memref<1x128xf32, #tpu.memory_space<vmem>>) attributes {dimension_semantics = [#tpu.dimension_semantics<parallel>], iteration_bounds = array<i64: 1>, scalar_prefetch = 0 : i64, scratch_operands = 0 : i64, tpu.core_type = #tpu.core_type<tc>, window_params = [{transform_indices = @transform_0, window_bounds = array<i64: 8, 128>}, {transform_indices = @transform_1, window_bounds = array<i64: 3, 128>}, {pipeline_mode = #tpu.pipeline_mode<synchronous>, transform_indices = @transform_2, window_bounds = array<i64: 18, 8>}, {pipeline_mode = #tpu.pipeline_mode<synchronous>, transform_indices = @transform_3, window_bounds = array<i64: 18, 3>}, {pipeline_mode = #tpu.pipeline_mode<synchronous>, transform_indices = @transform_4, window_bounds = array<i64: 18, 1>}, {pipeline_mode = #tpu.pipeline_mode<synchronous>, transform_indices = @transform_5, window_bounds = array<i64: 18, 18>}, {pipeline_mode = #tpu.pipeline_mode<synchronous>, transform_indices = @transform_6, window_bounds = array<i64: 18, 1>}, {pipeline_mode = #tpu.pipeline_mode<synchronous>, transform_indices = @transform_7, window_bounds = array<i64: 18, 18>}, {pipeline_mode = #tpu.pipeline_mode<synchronous>, transform_indices = @transform_8, window_bounds = array<i64: 18, 1>}, {pipeline_mode = #tpu.pipeline_mode<synchronous>, transform_indices = @transform_9, window_bounds = array<i64: 1, 18>}, {pipeline_mode = #tpu.pipeline_mode<synchronous>, transform_indices = @transform_10, window_bounds = array<i64: 1, 1>}, {transform_indices = @transform_11, window_bounds = array<i64: 1, 128>}]} {
    %c0 = arith.constant 0 : index
    %c0_0 = arith.constant 0 : index
    %0 = vector.load %arg3[%c0, %c0_0] : memref<18x8xf32, #tpu.memory_space<vmem>>, vector<18x8xf32>
    %c0_1 = arith.constant 0 : index
    %c0_2 = arith.constant 0 : index
    %1 = vector.load %arg1[%c0_1, %c0_2] : memref<8x128xf32, #tpu.memory_space<vmem>>, vector<8x128xf32>
    %cst = arith.constant dense<0.000000e+00> : vector<18x128xf32>
    %2 = tpu.matmul %0, %1, %cst {dimension_numbers = #tpu.dot_dimension_numbers<[1], [0], [0], [1], [0, 0, 1, 1], [], []>} : vector<18x8xf32>, vector<8x128xf32>, vector<18x128xf32> -> vector<18x128xf32>
    %c0_3 = arith.constant 0 : index
    %c0_4 = arith.constant 0 : index
    %3 = vector.load %arg4[%c0_3, %c0_4] : memref<18x3xf32, #tpu.memory_space<vmem>>, vector<18x3xf32>
    %c0_5 = arith.constant 0 : index
    %c0_6 = arith.constant 0 : index
    %4 = vector.load %arg2[%c0_5, %c0_6] : memref<3x128xf32, #tpu.memory_space<vmem>>, vector<3x128xf32>
    %cst_7 = arith.constant dense<0.000000e+00> : vector<18x128xf32>
    %5 = tpu.matmul %3, %4, %cst_7 {dimension_numbers = #tpu.dot_dimension_numbers<[1], [0], [0], [1], [0, 0, 1, 1], [], []>} : vector<18x3xf32>, vector<3x128xf32>, vector<18x128xf32> -> vector<18x128xf32>
    %6 = arith.addf %2, %5 : vector<18x128xf32>
    %c0_8 = arith.constant 0 : index
    %c0_9 = arith.constant 0 : index
    %7 = vector.load %arg5[%c0_8, %c0_9] : memref<18x1xf32, #tpu.memory_space<vmem>>, vector<18x1xf32>
    %8 = vector.broadcast %7 : vector<18x1xf32> to vector<18x128xf32>
    %9 = arith.addf %6, %8 : vector<18x128xf32>
    %10 = math.tanh %9 : vector<18x128xf32>
    %c0_10 = arith.constant 0 : index
    %c0_11 = arith.constant 0 : index
    %11 = vector.load %arg6[%c0_10, %c0_11] : memref<18x18xf32, #tpu.memory_space<vmem>>, vector<18x18xf32>
    %cst_12 = arith.constant dense<0.000000e+00> : vector<18x128xf32>
    %12 = tpu.matmul %11, %10, %cst_12 {dimension_numbers = #tpu.dot_dimension_numbers<[1], [0], [0], [1], [0, 0, 1, 1], [], []>} : vector<18x18xf32>, vector<18x128xf32>, vector<18x128xf32> -> vector<18x128xf32>
    %c0_13 = arith.constant 0 : index
    %c0_14 = arith.constant 0 : index
    %13 = vector.load %arg7[%c0_13, %c0_14] : memref<18x1xf32, #tpu.memory_space<vmem>>, vector<18x1xf32>
    %14 = vector.broadcast %13 : vector<18x1xf32> to vector<18x128xf32>
    %15 = arith.addf %12, %14 : vector<18x128xf32>
    %16 = math.tanh %15 : vector<18x128xf32>
    %c0_15 = arith.constant 0 : index
    %c0_16 = arith.constant 0 : index
    %17 = vector.load %arg8[%c0_15, %c0_16] : memref<18x18xf32, #tpu.memory_space<vmem>>, vector<18x18xf32>
    %cst_17 = arith.constant dense<0.000000e+00> : vector<18x128xf32>
    %18 = tpu.matmul %17, %16, %cst_17 {dimension_numbers = #tpu.dot_dimension_numbers<[1], [0], [0], [1], [0, 0, 1, 1], [], []>} : vector<18x18xf32>, vector<18x128xf32>, vector<18x128xf32> -> vector<18x128xf32>
    %c0_18 = arith.constant 0 : index
    %c0_19 = arith.constant 0 : index
    %19 = vector.load %arg9[%c0_18, %c0_19] : memref<18x1xf32, #tpu.memory_space<vmem>>, vector<18x1xf32>
    %20 = vector.broadcast %19 : vector<18x1xf32> to vector<18x128xf32>
    %21 = arith.addf %18, %20 : vector<18x128xf32>
    %22 = math.tanh %21 : vector<18x128xf32>
    %c0_20 = arith.constant 0 : index
    %c0_21 = arith.constant 0 : index
    %23 = vector.load %arg10[%c0_20, %c0_21] : memref<1x18xf32, #tpu.memory_space<vmem>>, vector<1x18xf32>
    %cst_22 = arith.constant dense<0.000000e+00> : vector<1x128xf32>
    %24 = tpu.matmul %23, %22, %cst_22 {dimension_numbers = #tpu.dot_dimension_numbers<[1], [0], [0], [1], [0, 0, 1, 1], [], []>} : vector<1x18xf32>, vector<18x128xf32>, vector<1x128xf32> -> vector<1x128xf32>
    %c0_23 = arith.constant 0 : index
    %c0_24 = arith.constant 0 : index
    %25 = vector.load %arg11[%c0_23, %c0_24] : memref<1x1xf32, #tpu.memory_space<vmem>>, vector<1x1xf32>
    %26 = vector.broadcast %25 : vector<1x1xf32> to vector<1x128xf32>
    %27 = arith.addf %24, %26 : vector<1x128xf32>
    %c0_25 = arith.constant 0 : index
    %c0_26 = arith.constant 0 : index
    %28 = vector.load %arg12[%c0_25, %c0_26] : memref<1x128xf32, #tpu.memory_space<vmem>>, vector<1x128xf32>
    tpu.vector_store %arg12[%c0_25, %c0_26], %27 {strides = array<i32>} : memref<1x128xf32, #tpu.memory_space<vmem>>, vector<1x128xf32>,
    return
  }
  func.func @transform_0(%arg0: i32) -> (i32, i32) {
    %c0_i32 = arith.constant 0 : i32
    %c0_i32_0 = arith.constant 0 : i32
    return %c0_i32, %arg0 : i32, i32
  }
  func.func @transform_1(%arg0: i32) -> (i32, i32) {
    %c0_i32 = arith.constant 0 : i32
    %c0_i32_0 = arith.constant 0 : i32
    return %c0_i32, %arg0 : i32, i32
  }
  func.func @transform_2(%arg0: i32) -> (i32, i32) {
    %c0_i32 = arith.constant 0 : i32
    %c0_i32_0 = arith.constant 0 : i32
    %c0_i32_1 = arith.constant 0 : i32
    return %c0_i32, %c0_i32_0 : i32, i32
  }
  func.func @transform_3(%arg0: i32) -> (i32, i32) {
    %c0_i32 = arith.constant 0 : i32
    %c0_i32_0 = arith.constant 0 : i32
    %c0_i32_1 = arith.constant 0 : i32
    return %c0_i32, %c0_i32_0 : i32, i32
  }
  func.func @transform_4(%arg0: i32) -> (i32, i32) {
    %c0_i32 = arith.constant 0 : i32
    %c0_i32_0 = arith.constant 0 : i32
    %c0_i32_1 = arith.constant 0 : i32
    return %c0_i32, %c0_i32_0 : i32, i32
  }
  func.func @transform_5(%arg0: i32) -> (i32, i32) {
    %c0_i32 = arith.constant 0 : i32
    %c0_i32_0 = arith.constant 0 : i32
    %c0_i32_1 = arith.constant 0 : i32
    return %c0_i32, %c0_i32_0 : i32, i32
  }
  func.func @transform_6(%arg0: i32) -> (i32, i32) {
    %c0_i32 = arith.constant 0 : i32
    %c0_i32_0 = arith.constant 0 : i32
    %c0_i32_1 = arith.constant 0 : i32
    return %c0_i32, %c0_i32_0 : i32, i32
  }
  func.func @transform_7(%arg0: i32) -> (i32, i32) {
    %c0_i32 = arith.constant 0 : i32
    %c0_i32_0 = arith.constant 0 : i32
    %c0_i32_1 = arith.constant 0 : i32
    return %c0_i32, %c0_i32_0 : i32, i32
  }
  func.func @transform_8(%arg0: i32) -> (i32, i32) {
    %c0_i32 = arith.constant 0 : i32
    %c0_i32_0 = arith.constant 0 : i32
    %c0_i32_1 = arith.constant 0 : i32
    return %c0_i32, %c0_i32_0 : i32, i32
  }
  func.func @transform_9(%arg0: i32) -> (i32, i32) {
    %c0_i32 = arith.constant 0 : i32
    %c0_i32_0 = arith.constant 0 : i32
    %c0_i32_1 = arith.constant 0 : i32
    return %c0_i32, %c0_i32_0 : i32, i32
  }
  func.func @transform_10(%arg0: i32) -> (i32, i32) {
    %c0_i32 = arith.constant 0 : i32
    %c0_i32_0 = arith.constant 0 : i32
    %c0_i32_1 = arith.constant 0 : i32
    return %c0_i32, %c0_i32_0 : i32, i32
  }
  func.func @transform_11(%arg0: i32) -> (i32, i32) {
    %c0_i32 = arith.constant 0 : i32
    %c0_i32_0 = arith.constant 0 : i32
    return %c0_i32, %arg0 : i32, i32
  }
}

</mosaic_0001>

<llo_original>
// kernel: net_forward.1
$region0: #{net_forward.1}
  #allocation0 [shape = 'u32[]', space=smem, size = 0x4, offset = 0x4, fixed_abs, tag = 'smem constant byte address 0x4 - core index']
  #allocation1 [shape = 'u32[144,128]{1,0:T(1,128)}', space=vmem, size = 0x12000, scoped, tag = 'internal scratch']
  #allocation2 [shape = 'f32[1,1]{1,0:T(1,128)S(1)}', space=vmem, size = 0x200, scoped, tag = 'scoped memory for net_forward.1']
  %s0 = inlined_call_operand.vmem [shape: f32[8,128], index: 0, kind: input, shape index: {}]
  %s1 = inlined_call_operand.vmem [shape: f32[3,128], index: 1, kind: input, shape index: {}]
  %s2 = inlined_call_operand.vmem [shape: f32[18,8], index: 2, kind: input, shape index: {}]
  %s3 = inlined_call_operand.vmem [shape: f32[18,3], index: 3, kind: input, shape index: {}]
  %s4 = inlined_call_operand.vmem [shape: f32[18,1], index: 4, kind: input, shape index: {}]
  %s5 = inlined_call_operand.vmem [shape: f32[18,18], index: 5, kind: input, shape index: {}]
  %s6 = inlined_call_operand.vmem [shape: f32[18,1], index: 6, kind: input, shape index: {}]
  %s7 = inlined_call_operand.vmem [shape: f32[18,18], index: 7, kind: input, shape index: {}]
  %s8 = inlined_call_operand.vmem [shape: f32[18,1], index: 8, kind: input, shape index: {}]
  %s9 = inlined_call_operand.vmem [shape: f32[1,18], index: 9, kind: input, shape index: {}]
  %s10 = inlined_call_operand.<no memory space> [shape: f32[1,1], index: 10, kind: input, shape index: {}]
  %s11 = inlined_call_operand.vmem [shape: f32[1,128], index: 11, kind: output, shape index: {}]
  %s12 = sld [smem:[#allocation0]]
  $region54: #{net_forward.1} parent=0
    _
  %s14 = ssub.s32 1, %s12
  %s15 = scalar_select 0, %s14, %s12
  %v16 = vstv %s10
  %17 = vst [vmem:[#allocation2] sm:$0x1] %v16
  // Predicated region
  $region2: #{net_forward.1} parent=0 // pred_check
    _
  $region3: #{net_forward.1} parent=0 // pred_check_branch
    %19 = sbr.rel (0) target = $region5
  $region4: #{net_forward.1} parent=0 // pred_region
    _
  $region5: #{net_forward.1} parent=0 // pred_fallthru
    _
  // Predicated region
  $region6: #{net_forward.1} parent=0 // pred_check
    _
  $region7: #{net_forward.1} parent=0 // pred_check_branch
    %21 = sbr.rel (0) target = $region9
  $region8: #{net_forward.1} parent=0 // pred_region
    _
  $region9: #{net_forward.1} parent=0 // pred_fallthru
    _
  // Predicated region
  $region10: #{net_forward.1} parent=0 // pred_check
    _
  $region11: #{net_forward.1} parent=0 // pred_check_branch
    %23 = sbr.rel (0) target = $region13
  $region12: #{net_forward.1} parent=0 // pred_region
    _
  $region13: #{net_forward.1} parent=0 // pred_fallthru
    _
  // Predicated region
  $region14: #{net_forward.1} parent=0 // pred_check
    _
  $region15: #{net_forward.1} parent=0 // pred_check_branch
    %25 = sbr.rel (0) target = $region17
  $region16: #{net_forward.1} parent=0 // pred_region
    _
  $region17: #{net_forward.1} parent=0 // pred_fallthru
    _
  // Predicated region
  $region18: #{net_forward.1} parent=0 // pred_check
    _
  $region19: #{net_forward.1} parent=0 // pred_check_branch
    %27 = sbr.rel (0) target = $region21
  $region20: #{net_forward.1} parent=0 // pred_region
    _
  $region21: #{net_forward.1} parent=0 // pred_fallthru
    _
  // Predicated region
  $region22: #{net_forward.1} parent=0 // pred_check
    _
  $region23: #{net_forward.1} parent=0 // pred_check_branch
    %29 = sbr.rel (0) target = $region25
  $region24: #{net_forward.1} parent=0 // pred_region
    _
  $region25: #{net_forward.1} parent=0 // pred_fallthru
    _
  // Predicated region
  $region26: #{net_forward.1} parent=0 // pred_check
    _
  $region27: #{net_forward.1} parent=0 // pred_check_branch
    %31 = sbr.rel (0) target = $region29
  $region28: #{net_forward.1} parent=0 // pred_region
    _
  $region29: #{net_forward.1} parent=0 // pred_fallthru
    _
  // Predicated region
  $region30: #{net_forward.1} parent=0 // pred_check
    _
  $region31: #{net_forward.1} parent=0 // pred_check_branch
    %33 = sbr.rel (0) target = $region33
  $region32: #{net_forward.1} parent=0 // pred_region
    _
  $region33: #{net_forward.1} parent=0 // pred_fallthru
    _
  // Predicated region
  $region34: #{net_forward.1} parent=0 // pred_check
    _
  $region35: #{net_forward.1} parent=0 // pred_check_branch
    %35 = sbr.rel (0) target = $region37
  $region36: #{net_forward.1} parent=0 // pred_region
    _
  $region37: #{net_forward.1} parent=0 // pred_fallthru
    _
  // Predicated region
  $region38: #{net_forward.1} parent=0 // pred_check
    _
  $region39: #{net_forward.1} parent=0 // pred_check_branch
    %37 = sbr.rel (0) target = $region41
  $region40: #{net_forward.1} parent=0 // pred_region
    _
  $region41: #{net_forward.1} parent=0 // pred_fallthru
    _
  // Predicated region
  $region42: #{net_forward.1} parent=0 // pred_check
    _
  $region43: #{net_forward.1} parent=0 // pred_check_branch
    %39 = sbr.rel (0) target = $region45
  $region44: #{net_forward.1} parent=0 // pred_region
    _
  $region45: #{net_forward.1} parent=0 // pred_fallthru
    _
  %v40 = vld [vmem:[%s2] sm:$0xff]
  %v41 = vld [vmem:[%s2 + $0x8] sm:$0xff]
  %v42 = vld [vmem:[%s2 + $0x10] sm:$0x3]
  %v43 = vld [vmem:[%s0] sm:$0xff]
  %v44 = vld [vmem:[%s3] sm:$0xff]
  %v45 = vld [vmem:[%s3 + $0x8] sm:$0xff]
  %v46 = vld [vmem:[%s3 + $0x10] sm:$0x3]
  %v47 = vld [vmem:[%s1] sm:$0x7]
  %vm48 = vcmask 23552
  %v50 = vsel %vm48, %v44, 0
  %v53 = vsel %vm48, %v45, 0
  %v56 = vsel %vm48, %v46, 0
  %vm58 = vcmask 1042432
  %v60 = vsel %vm58, %v47, 0
  %62 = vmatprep.subr.mxu0 0.0
  %63 = vmatpush1.msra.mxu0 %v60
  %64 = vmatprep.subr.mxu0 0.0
  %65 = vmatpush1.msra.mxu0 0.0
  %66 = vmatprep.subr.mxu0 0.0
  %67 = vmatpush1.msra.mxu0 0.0
  %68 = vmatprep.subr.mxu0 0.0
  %69 = vmatpush1.msra.mxu0 0.0
  %70 = vmatprep.subr.mxu0 0.0
  %71 = vmatpush1.msra.mxu0 0.0
  %72 = vmatprep.subr.mxu0 0.0
  %73 = vmatpush1.msra.mxu0 0.0
  %74 = vmatprep.subr.mxu0 0.0
  %75 = vmatpush1.msra.mxu0 0.0
  %76 = vmatprep.subr.mxu0 0.0
  %77 = vmatpush1.msra.mxu0 0.0
  %78 = vmatprep.subr.mxu0 0.0
  %79 = vmatpush1.msra.mxu0 0.0
  %80 = vmatprep.subr.mxu0 0.0
  %81 = vmatpush1.msra.mxu0 0.0
  %82 = vmatprep.subr.mxu0 0.0
  %83 = vmatpush1.msra.mxu0 0.0
  %84 = vmatprep.subr.mxu0 0.0
  %85 = vmatpush1.msra.mxu0 0.0
  %86 = vmatprep.subr.mxu0 0.0
  %87 = vmatpush1.msra.mxu0 0.0
  %88 = vmatprep.subr.mxu0 0.0
  %89 = vmatpush1.msra.mxu0 0.0
  %90 = vmatprep.subr.mxu0 0.0
  %91 = vmatpush1.msra.mxu0 0.0
  %92 = vmatprep.subr.mxu0 0.0
  %93 = vmatpush1.msra.mxu0 0.0
  %94 = vmatprep.subr.mxu0 0.0
  %95 = vmatpush1.msra.mxu0 0.0
  %96 = vmatprep.subr.mxu0 0.0
  %97 = vmatpush1.msra.mxu0 0.0
  %98 = vmatprep.subr.mxu0 0.0
  %99 = vmatpush1.msra.mxu0 0.0
  %100 = vmatprep.subr.mxu0 0.0
  %101 = vmatpush1.msra.mxu0 0.0
  %102 = vmatprep.subr.mxu0 0.0
  %103 = vmatpush1.msra.mxu0 0.0
  %104 = vmatprep.subr.mxu0 0.0
  %105 = vmatpush1.msra.mxu0 0.0
  %106 = vmatprep.subr.mxu0 0.0
  %107 = vmatpush1.msra.mxu0 0.0
  %108 = vmatprep.subr.mxu0 0.0
  %109 = vmatpush1.msra.mxu0 0.0
  %110 = vmatprep.subr.mxu0 0.0
  %111 = vmatpush1.msra.mxu0 0.0
  %112 = vmatprep.subr.mxu0 0.0
  %113 = vmatpush1.msra.mxu0 0.0
  %114 = vmatprep.subr.mxu0 0.0
  %115 = vmatpush1.msra.mxu0 0.0
  %116 = vmatprep.subr.mxu0 0.0
  %117 = vmatpush1.msra.mxu0 0.0
  %118 = vmatprep.subr.mxu0 0.0
  %119 = vmatpush1.msra.mxu0 0.0
  %120 = vmatprep.subr.mxu0 0.0
  %121 = vmatpush1.msra.mxu0 0.0
  %122 = vmatprep.subr.mxu0 0.0
  %123 = vmatpush1.msra.mxu0 0.0
  %124 = vmatprep.subr.mxu0 0.0
  %125 = vmatpush1.msra.mxu0 0.0
  %126 = vmatprep.mubr.f32.mxu0 0.0
  %127 = vmatmul.mubr.f32.gmra.mrb[0].mxu0 %v50
  %v128 = vpop.f32.mrb[0].mxu0
  %v129 = vadd.f32 0.0, %v128
  %v130 = vpop.f32.mrb[0].mxu0
  %131 = vmatprep.mubr.f32.mxu0 0.0
  %132 = vmatmul.mubr.f32.gmra.mrb[0].mxu0 %v53
  %v133 = vpop.f32.mrb[0].mxu0
  %v134 = vadd.f32 0.0, %v133
  %v135 = vpop.f32.mrb[0].mxu0
  %136 = vmatprep.mubr.f32.mxu0 0.0
  %137 = vmatmul.mubr.f32.gmra.mrb[0].mxu0 %v56
  %v138 = vpop.f32.mrb[0].mxu0
  %v139 = vadd.f32 0.0, %v138
  %v140 = vpop.f32.mrb[0].mxu0
  %141 = vdwg.mxu0
  %vm142 = vcmask 64512
  %v144 = vsel %vm142, %v40, 0
  %v147 = vsel %vm142, %v41, 0
  %v150 = vsel %vm142, %v42, 0
  %152 = vmatprep.subr.mxu0 0.0
  %153 = vmatpush1.msra.mxu0 %v43
  %154 = vmatprep.subr.mxu0 0.0
  %155 = vmatpush1.msra.mxu0 0.0
  %156 = vmatprep.subr.mxu0 0.0
  %157 = vmatpush1.msra.mxu0 0.0
  %158 = vmatprep.subr.mxu0 0.0
  %159 = vmatpush1.msra.mxu0 0.0
  %160 = vmatprep.subr.mxu0 0.0
  %161 = vmatpush1.msra.mxu0 0.0
  %162 = vmatprep.subr.mxu0 0.0
  %163 = vmatpush1.msra.mxu0 0.0
  %164 = vmatprep.subr.mxu0 0.0
  %165 = vmatpush1.msra.mxu0 0.0
  %166 = vmatprep.subr.mxu0 0.0
  %167 = vmatpush1.msra.mxu0 0.0
  %168 = vmatprep.subr.mxu0 0.0
  %169 = vmatpush1.msra.mxu0 0.0
  %170 = vmatprep.subr.mxu0 0.0
  %171 = vmatpush1.msra.mxu0 0.0
  %172 = vmatprep.subr.mxu0 0.0
  %173 = vmatpush1.msra.mxu0 0.0
  %174 = vmatprep.subr.mxu0 0.0
  %175 = vmatpush1.msra.mxu0 0.0
  %176 = vmatprep.subr.mxu0 0.0
  %177 = vmatpush1.msra.mxu0 0.0
  %178 = vmatprep.subr.mxu0 0.0
  %179 = vmatpush1.msra.mxu0 0.0
  %180 = vmatprep.subr.mxu0 0.0
  %181 = vmatpush1.msra.mxu0 0.0
  %182 = vmatprep.subr.mxu0 0.0
  %183 = vmatpush1.msra.mxu0 0.0
  %184 = vmatprep.subr.mxu0 0.0
  %185 = vmatpush1.msra.mxu0 0.0
  %186 = vmatprep.subr.mxu0 0.0
  %187 = vmatpush1.msra.mxu0 0.0
  %188 = vmatprep.subr.mxu0 0.0
  %189 = vmatpush1.msra.mxu0 0.0
  %190 = vmatprep.subr.mxu0 0.0
  %191 = vmatpush1.msra.mxu0 0.0
  %192 = vmatprep.subr.mxu0 0.0
  %193 = vmatpush1.msra.mxu0 0.0
  %194 = vmatprep.subr.mxu0 0.0
  %195 = vmatpush1.msra.mxu0 0.0
  %196 = vmatprep.subr.mxu0 0.0
  %197 = vmatpush1.msra.mxu0 0.0
  %198 = vmatprep.subr.mxu0 0.0
  %199 = vmatpush1.msra.mxu0 0.0
  %200 = vmatprep.subr.mxu0 0.0
  %201 = vmatpush1.msra.mxu0 0.0
  %202 = vmatprep.subr.mxu0 0.0
  %203 = vmatpush1.msra.mxu0 0.0
  %204 = vmatprep.subr.mxu0 0.0
  %205 = vmatpush1.msra.mxu0 0.0
  %206 = vmatprep.subr.mxu0 0.0
  %207 = vmatpush1.msra.mxu0 0.0
  %208 = vmatprep.subr.mxu0 0.0
  %209 = vmatpush1.msra.mxu0 0.0
  %210 = vmatprep.subr.mxu0 0.0
  %211 = vmatpush1.msra.mxu0 0.0
  %212 = vmatprep.subr.mxu0 0.0
  %213 = vmatpush1.msra.mxu0 0.0
  %214 = vmatprep.subr.mxu0 0.0
  %215 = vmatpush1.msra.mxu0 0.0
  %216 = vmatprep.mubr.f32.mxu0 0.0
  %217 = vmatmul.mubr.f32.gmra.mrb[0].mxu0 %v144
  %v218 = vpop.f32.mrb[0].mxu0
  %v219 = vadd.f32 %v129, %v218
  %v220 = vpop.f32.mrb[0].mxu0
  %221 = vmatprep.mubr.f32.mxu0 0.0
  %222 = vmatmul.mubr.f32.gmra.mrb[0].mxu0 %v147
  %v223 = vpop.f32.mrb[0].mxu0
  %v224 = vadd.f32 %v134, %v223
  %v225 = vpop.f32.mrb[0].mxu0
  %226 = vmatprep.mubr.f32.mxu0 0.0
  %227 = vmatmul.mubr.f32.gmra.mrb[0].mxu0 %v150
  %v228 = vpop.f32.mrb[0].mxu0
  %v229 = vadd.f32 %v139, %v228
  %v230 = vpop.f32.mrb[0].mxu0
  %231 = vdwg.mxu0
  %v232 = vld [vmem:[%s4] sm:$0xff]
  %v233 = vld [vmem:[%s4 + $0x8] sm:$0xff]
  %v234 = vld [vmem:[%s4 + $0x10] sm:$0x3]
  %236 = vset.pattern.permute.xlu0 0
  %237 = vperm.xlu0 %236, %v232
  %v238 = vpop.permute.xlu0 %237
  %241 = vset.pattern.permute.xlu0 0
  %242 = vperm.xlu0 %241, %v233
  %v243 = vpop.permute.xlu0 %242
  %246 = vset.pattern.permute.xlu0 0
  %247 = vperm.xlu0 %246, %v234
  %v248 = vpop.permute.xlu0 %247
  %v250 = vadd.f32 %v219, %v238
  %v251 = vadd.f32 %v224, %v243
  %v252 = vadd.f32 %v229, %v248
  %v253 = vtanh.pop %v250
  %v254 = vtanh.pop %v251
  %v255 = vtanh.pop %v252
  %v256 = vld [vmem:[%s5] sm:$0xff]
  %v257 = vld [vmem:[%s5 + $0x8] sm:$0xff]
  %v258 = vld [vmem:[%s5 + $0x10] sm:$0x3]
  %v259 = vld [vmem:[%s6] sm:$0xff]
  %v260 = vld [vmem:[%s6 + $0x8] sm:$0xff]
  %v261 = vld [vmem:[%s6 + $0x10] sm:$0x3]
  %263 = vset.pattern.permute.xlu0 0
  %264 = vperm.xlu0 %263, %v259
  %v265 = vpop.permute.xlu0 %264
  %268 = vset.pattern.permute.xlu0 0
  %269 = vperm.xlu0 %268, %v260
  %v270 = vpop.permute.xlu0 %269
  %273 = vset.pattern.permute.xlu0 0
  %274 = vperm.xlu0 %273, %v261
  %v275 = vpop.permute.xlu0 %274
  %vm277 = vcmask 146432
  %v279 = vsel %vm277, %v256, 0
  %v282 = vsel %vm277, %v257, 0
  %v285 = vsel %vm277, %v258, 0
  %vm287 = vcmask 1041408
  %v289 = vsel %vm287, %v255, 0
  %291 = vmatprep.subr.mxu0 0.0
  %292 = vmatpush1.msra.mxu0 %v253
  %293 = vmatprep.subr.mxu0 0.0
  %294 = vmatpush1.msra.mxu0 %v254
  %295 = vmatprep.subr.mxu0 0.0
  %296 = vmatpush1.msra.mxu0 %v289
  %297 = vmatprep.subr.mxu0 0.0
  %298 = vmatpush1.msra.mxu0 0.0
  %299 = vmatprep.subr.mxu0 0.0
  %300 = vmatpush1.msra.mxu0 0.0
  %301 = vmatprep.subr.mxu0 0.0
  %302 = vmatpush1.msra.mxu0 0.0
  %303 = vmatprep.subr.mxu0 0.0
  %304 = vmatpush1.msra.mxu0 0.0
  %305 = vmatprep.subr.mxu0 0.0
  %306 = vmatpush1.msra.mxu0 0.0
  %307 = vmatprep.subr.mxu0 0.0
  %308 = vmatpush1.msra.mxu0 0.0
  %309 = vmatprep.subr.mxu0 0.0
  %310 = vmatpush1.msra.mxu0 0.0
  %311 = vmatprep.subr.mxu0 0.0
  %312 = vmatpush1.msra.mxu0 0.0
  %313 = vmatprep.subr.mxu0 0.0
  %314 = vmatpush1.msra.mxu0 0.0
  %315 = vmatprep.subr.mxu0 0.0
  %316 = vmatpush1.msra.mxu0 0.0
  %317 = vmatprep.subr.mxu0 0.0
  %318 = vmatpush1.msra.mxu0 0.0
  %319 = vmatprep.subr.mxu0 0.0
  %320 = vmatpush1.msra.mxu0 0.0
  %321 = vmatprep.subr.mxu0 0.0
  %322 = vmatpush1.msra.mxu0 0.0
  %323 = vmatprep.subr.mxu0 0.0
  %324 = vmatpush1.msra.mxu0 0.0
  %325 = vmatprep.subr.mxu0 0.0
  %326 = vmatpush1.msra.mxu0 0.0
  %327 = vmatprep.subr.mxu0 0.0
  %328 = vmatpush1.msra.mxu0 0.0
  %329 = vmatprep.subr.mxu0 0.0
  %330 = vmatpush1.msra.mxu0 0.0
  %331 = vmatprep.subr.mxu0 0.0
  %332 = vmatpush1.msra.mxu0 0.0
  %333 = vmatprep.subr.mxu0 0.0
  %334 = vmatpush1.msra.mxu0 0.0
  %335 = vmatprep.subr.mxu0 0.0
  %336 = vmatpush1.msra.mxu0 0.0
  %337 = vmatprep.subr.mxu0 0.0
  %338 = vmatpush1.msra.mxu0 0.0
  %339 = vmatprep.subr.mxu0 0.0
  %340 = vmatpush1.msra.mxu0 0.0
  %341 = vmatprep.subr.mxu0 0.0
  %342 = vmatpush1.msra.mxu0 0.0
  %343 = vmatprep.subr.mxu0 0.0
  %344 = vmatpush1.msra.mxu0 0.0
  %345 = vmatprep.subr.mxu0 0.0
  %346 = vmatpush1.msra.mxu0 0.0
  %347 = vmatprep.subr.mxu0 0.0
  %348 = vmatpush1.msra.mxu0 0.0
  %349 = vmatprep.subr.mxu0 0.0
  %350 = vmatpush1.msra.mxu0 0.0
  %351 = vmatprep.subr.mxu0 0.0
  %352 = vmatpush1.msra.mxu0 0.0
  %353 = vmatprep.subr.mxu0 0.0
  %354 = vmatpush1.msra.mxu0 0.0
  %355 = vmatprep.mubr.f32.mxu0 0.0
  %356 = vmatmul.mubr.f32.gmra.mrb[0].mxu0 %v279
  %v357 = vpop.f32.mrb[0].mxu0
  %v358 = vadd.f32 %v265, %v357
  %v359 = vpop.f32.mrb[0].mxu0
  %360 = vmatprep.mubr.f32.mxu0 0.0
  %361 = vmatmul.mubr.f32.gmra.mrb[0].mxu0 %v282
  %v362 = vpop.f32.mrb[0].mxu0
  %v363 = vadd.f32 %v270, %v362
  %v364 = vpop.f32.mrb[0].mxu0
  %365 = vmatprep.mubr.f32.mxu0 0.0
  %366 = vmatmul.mubr.f32.gmra.mrb[0].mxu0 %v285
  %v367 = vpop.f32.mrb[0].mxu0
  %v368 = vadd.f32 %v275, %v367
  %v369 = vpop.f32.mrb[0].mxu0
  %370 = vdwg.mxu0
  %v371 = vtanh.pop %v358
  %v372 = vtanh.pop %v363
  %v373 = vtanh.pop %v368
  %v374 = vld [vmem:[%s7] sm:$0xff]
  %v375 = vld [vmem:[%s7 + $0x8] sm:$0xff]
  %v376 = vld [vmem:[%s7 + $0x10] sm:$0x3]
  %v377 = vld [vmem:[%s8] sm:$0xff]
  %v378 = vld [vmem:[%s8 + $0x8] sm:$0xff]
  %v379 = vld [vmem:[%s8 + $0x10] sm:$0x3]
  %381 = vset.pattern.permute.xlu0 0
  %382 = vperm.xlu0 %381, %v377
  %v383 = vpop.permute.xlu0 %382
  %386 = vset.pattern.permute.xlu0 0
  %387 = vperm.xlu0 %386, %v378
  %v388 = vpop.permute.xlu0 %387
  %391 = vset.pattern.permute.xlu0 0
  %392 = vperm.xlu0 %391, %v379
  %v393 = vpop.permute.xlu0 %392
  %v396 = vsel %vm277, %v374, 0
  %v399 = vsel %vm277, %v375, 0
  %v402 = vsel %vm277, %v376, 0
  %v405 = vsel %vm287, %v373, 0
  %407 = vmatprep.subr.mxu0 0.0
  %408 = vmatpush1.msra.mxu0 %v371
  %409 = vmatprep.subr.mxu0 0.0
  %410 = vmatpush1.msra.mxu0 %v372
  %411 = vmatprep.subr.mxu0 0.0
  %412 = vmatpush1.msra.mxu0 %v405
  %413 = vmatprep.subr.mxu0 0.0
  %414 = vmatpush1.msra.mxu0 0.0
  %415 = vmatprep.subr.mxu0 0.0
  %416 = vmatpush1.msra.mxu0 0.0
  %417 = vmatprep.subr.mxu0 0.0
  %418 = vmatpush1.msra.mxu0 0.0
  %419 = vmatprep.subr.mxu0 0.0
  %420 = vmatpush1.msra.mxu0 0.0
  %421 = vmatprep.subr.mxu0 0.0
  %422 = vmatpush1.msra.mxu0 0.0
  %423 = vmatprep.subr.mxu0 0.0
  %424 = vmatpush1.msra.mxu0 0.0
  %425 = vmatprep.subr.mxu0 0.0
  %426 = vmatpush1.msra.mxu0 0.0
  %427 = vmatprep.subr.mxu0 0.0
  %428 = vmatpush1.msra.mxu0 0.0
  %429 = vmatprep.subr.mxu0 0.0
  %430 = vmatpush1.msra.mxu0 0.0
  %431 = vmatprep.subr.mxu0 0.0
  %432 = vmatpush1.msra.mxu0 0.0
  %433 = vmatprep.subr.mxu0 0.0
  %434 = vmatpush1.msra.mxu0 0.0
  %435 = vmatprep.subr.mxu0 0.0
  %436 = vmatpush1.msra.mxu0 0.0
  %437 = vmatprep.subr.mxu0 0.0
  %438 = vmatpush1.msra.mxu0 0.0
  %439 = vmatprep.subr.mxu0 0.0
  %440 = vmatpush1.msra.mxu0 0.0
  %441 = vmatprep.subr.mxu0 0.0
  %442 = vmatpush1.msra.mxu0 0.0
  %443 = vmatprep.subr.mxu0 0.0
  %444 = vmatpush1.msra.mxu0 0.0
  %445 = vmatprep.subr.mxu0 0.0
  %446 = vmatpush1.msra.mxu0 0.0
  %447 = vmatprep.subr.mxu0 0.0
  %448 = vmatpush1.msra.mxu0 0.0
  %449 = vmatprep.subr.mxu0 0.0
  %450 = vmatpush1.msra.mxu0 0.0
  %451 = vmatprep.subr.mxu0 0.0
  %452 = vmatpush1.msra.mxu0 0.0
  %453 = vmatprep.subr.mxu0 0.0
  %454 = vmatpush1.msra.mxu0 0.0
  %455 = vmatprep.subr.mxu0 0.0
  %456 = vmatpush1.msra.mxu0 0.0
  %457 = vmatprep.subr.mxu0 0.0
  %458 = vmatpush1.msra.mxu0 0.0
  %459 = vmatprep.subr.mxu0 0.0
  %460 = vmatpush1.msra.mxu0 0.0
  %461 = vmatprep.subr.mxu0 0.0
  %462 = vmatpush1.msra.mxu0 0.0
  %463 = vmatprep.subr.mxu0 0.0
  %464 = vmatpush1.msra.mxu0 0.0
  %465 = vmatprep.subr.mxu0 0.0
  %466 = vmatpush1.msra.mxu0 0.0
  %467 = vmatprep.subr.mxu0 0.0
  %468 = vmatpush1.msra.mxu0 0.0
  %469 = vmatprep.subr.mxu0 0.0
  %470 = vmatpush1.msra.mxu0 0.0
  %471 = vmatprep.mubr.f32.mxu0 0.0
  %472 = vmatmul.mubr.f32.gmra.mrb[0].mxu0 %v396
  %v473 = vpop.f32.mrb[0].mxu0
  %v474 = vadd.f32 %v383, %v473
  %v475 = vpop.f32.mrb[0].mxu0
  %476 = vmatprep.mubr.f32.mxu0 0.0
  %477 = vmatmul.mubr.f32.gmra.mrb[0].mxu0 %v399
  %v478 = vpop.f32.mrb[0].mxu0
  %v479 = vadd.f32 %v388, %v478
  %v480 = vpop.f32.mrb[0].mxu0
  %481 = vmatprep.mubr.f32.mxu0 0.0
  %482 = vmatmul.mubr.f32.gmra.mrb[0].mxu0 %v402
  %v483 = vpop.f32.mrb[0].mxu0
  %v484 = vadd.f32 %v393, %v483
  %v485 = vpop.f32.mrb[0].mxu0
  %486 = vdwg.mxu0
  %v487 = vtanh.pop %v474
  %v488 = vtanh.pop %v479
  %v489 = vtanh.pop %v484
  %v490 = vld [vmem:[%s9] sm:$0x1]
  %v491 = vld [vmem:[#allocation2] sm:$0x1]
  %493 = vset.pattern.permute.xlu0 0
  %494 = vperm.xlu0 %493, %v491
  %v495 = vpop.permute.xlu0 %494
  %v497 = vlaneseq
  %v498 = vshrl.u32 %v497, 7
  %v499 = vsub.s32 0, %v498
  %v500 = vrot.slane %v495, %v499
  %v502 = vsel %vm277, %v490, 0
  %v505 = vsel %vm287, %v489, 0
  %507 = vmatprep.subr.mxu0 0.0
  %508 = vmatpush1.msra.mxu0 %v487
  %509 = vmatprep.subr.mxu0 0.0
  %510 = vmatpush1.msra.mxu0 %v488
  %511 = vmatprep.subr.mxu0 0.0
  %512 = vmatpush1.msra.mxu0 %v505
  %513 = vmatprep.subr.mxu0 0.0
  %514 = vmatpush1.msra.mxu0 0.0
  %515 = vmatprep.subr.mxu0 0.0
  %516 = vmatpush1.msra.mxu0 0.0
  %517 = vmatprep.subr.mxu0 0.0
  %518 = vmatpush1.msra.mxu0 0.0
  %519 = vmatprep.subr.mxu0 0.0
  %520 = vmatpush1.msra.mxu0 0.0
  %521 = vmatprep.subr.mxu0 0.0
  %522 = vmatpush1.msra.mxu0 0.0
  %523 = vmatprep.subr.mxu0 0.0
  %524 = vmatpush1.msra.mxu0 0.0
  %525 = vmatprep.subr.mxu0 0.0
  %526 = vmatpush1.msra.mxu0 0.0
  %527 = vmatprep.subr.mxu0 0.0
  %528 = vmatpush1.msra.mxu0 0.0
  %529 = vmatprep.subr.mxu0 0.0
  %530 = vmatpush1.msra.mxu0 0.0
  %531 = vmatprep.subr.mxu0 0.0
  %532 = vmatpush1.msra.mxu0 0.0
  %533 = vmatprep.subr.mxu0 0.0
  %534 = vmatpush1.msra.mxu0 0.0
  %535 = vmatprep.subr.mxu0 0.0
  %536 = vmatpush1.msra.mxu0 0.0
  %537 = vmatprep.subr.mxu0 0.0
  %538 = vmatpush1.msra.mxu0 0.0
  %539 = vmatprep.subr.mxu0 0.0
  %540 = vmatpush1.msra.mxu0 0.0
  %541 = vmatprep.subr.mxu0 0.0
  %542 = vmatpush1.msra.mxu0 0.0
  %543 = vmatprep.subr.mxu0 0.0
  %544 = vmatpush1.msra.mxu0 0.0
  %545 = vmatprep.subr.mxu0 0.0
  %546 = vmatpush1.msra.mxu0 0.0
  %547 = vmatprep.subr.mxu0 0.0
  %548 = vmatpush1.msra.mxu0 0.0
  %549 = vmatprep.subr.mxu0 0.0
  %550 = vmatpush1.msra.mxu0 0.0
  %551 = vmatprep.subr.mxu0 0.0
  %552 = vmatpush1.msra.mxu0 0.0
  %553 = vmatprep.subr.mxu0 0.0
  %554 = vmatpush1.msra.mxu0 0.0
  %555 = vmatprep.subr.mxu0 0.0
  %556 = vmatpush1.msra.mxu0 0.0
  %557 = vmatprep.subr.mxu0 0.0
  %558 = vmatpush1.msra.mxu0 0.0
  %559 = vmatprep.subr.mxu0 0.0
  %560 = vmatpush1.msra.mxu0 0.0
  %561 = vmatprep.subr.mxu0 0.0
  %562 = vmatpush1.msra.mxu0 0.0
  %563 = vmatprep.subr.mxu0 0.0
  %564 = vmatpush1.msra.mxu0 0.0
  %565 = vmatprep.subr.mxu0 0.0
  %566 = vmatpush1.msra.mxu0 0.0
  %567 = vmatprep.subr.mxu0 0.0
  %568 = vmatpush1.msra.mxu0 0.0
  %569 = vmatprep.subr.mxu0 0.0
  %570 = vmatpush1.msra.mxu0 0.0
  %571 = vmatprep.mubr.f32.mxu0 0.0
  %572 = vmatmul.mubr.f32.gmra.mrb[0].mxu0 %v502
  %v573 = vpop.f32.mrb[0].mxu0
  %v574 = vadd.f32 %v500, %v573
  %v575 = vpop.f32.mrb[0].mxu0
  %576 = vdwg.mxu0
  %577 = vst [vmem:[%s11] sm:$0x1] %v574
  // Predicated region
  $region46: #{net_forward.1} parent=0 // pred_check
    _
  $region47: #{net_forward.1} parent=0 // pred_check_branch
    %579 = sbr.rel (0) target = $region49
  $region48: #{net_forward.1} parent=0 // pred_region
    _
  $region49: #{net_forward.1} parent=0 // pred_fallthru
    _
  // Predicated region
  $region50: #{net_forward.1} parent=0 // pred_check
    _
  $region51: #{net_forward.1} parent=0 // pred_check_branch
    %581 = sbr.rel (0) target = $region53
  $region52: #{net_forward.1} parent=0 // pred_region
    _
  $region53: #{net_forward.1} parent=0 // pred_fallthru
    _

</llo_original>
